<compile_context>
chip_gen: v5e
topology: v5e:2x2
jax: 0.10.0
libtpu: 0.0.40
codegen_flags: <defaults>
</compile_context>

<pallas_src>
import functools
import math

import jax
import jax.numpy as jnp
from jax.experimental import pallas as pl
from jax.experimental.pallas import tpu as pltpu


# ----------------- pure-JAX reference helpers (check path only) ----------------

def _pad2(x, pad):
    """Zero-pad the last two dims of x by `pad` on each side."""
    zr = jnp.zeros(x.shape[:-2] + (pad, x.shape[-1]), x.dtype)
    x = jnp.concatenate([zr, x, zr], axis=-2)
    zc = jnp.zeros(x.shape[:-1] + (pad,), x.dtype)
    return jnp.concatenate([zc, x, zc], axis=-1)


def conv_csc(a, B):
    """CSC synthesis: out[c] = sum_p corr2d_same(a[p, c], B[p, c])."""
    P, C, M, N = a.shape
    k = B.shape[-1]
    pad = k // 2
    ap = _pad2(a, pad)
    out = jnp.zeros((C, M, N), a.dtype)
    for di in range(k):
        for dj in range(k):
            out = out + jnp.sum(
                B[:, :, di, dj][:, :, None, None] * ap[:, :, di:di + M, dj:dj + N],
                axis=0)
    return out


def convT_csc(r, B):
    """Adjoint of conv_csc. r: (C, M, N), B: (P, C, k, k) -> (P, C, M, N)."""
    C, M, N = r.shape
    P, _, k, _ = B.shape
    pad = k // 2
    rp = _pad2(r, pad)
    out = jnp.zeros((P, C, M, N), r.dtype)
    for di in range(k):
        for dj in range(k):
            oi = 2 * pad - di
            oj = 2 * pad - dj
            out = out + (B[:, :, di, dj][:, :, None, None]
                         * rp[None, :, oi:oi + M, oj:oj + N])
    return out


def D(x):
    """Forward finite differences. x: (C, M, N) -> (2, C, M, N)."""
    C, M, N = x.shape
    dv = jnp.concatenate([x[:, 1:, :] - x[:, :-1, :],
                          jnp.zeros((C, 1, N), x.dtype)], axis=1)
    dh = jnp.concatenate([x[:, :, 1:] - x[:, :, :-1],
                          jnp.zeros((C, M, 1), x.dtype)], axis=2)
    return jnp.stack([dv, dh], axis=0)


def Dt(y):
    """Adjoint of D. y: (2, C, M, N) -> (C, M, N)."""
    yv, yh = y[0], y[1]
    dtv = jnp.concatenate([-yv[:, :1, :],
                           yv[:, :-2, :] - yv[:, 1:-1, :],
                           yv[:, -2:-1, :]], axis=1)
    dth = jnp.concatenate([-yh[:, :, :1],
                           yh[:, :, :-2] - yh[:, :, 1:-1],
                           yh[:, :, -2:-1]], axis=2)
    return dtv + dth


def prox_box(x):
    return jnp.clip(x, 0.0, 1.0)


def prox_l1(a, t):
    return jnp.sign(a) * jnp.maximum(jnp.abs(a) - t, 0.0)


def prox_l12(y, t):
    nrm = jnp.sqrt(jnp.sum(y * y, axis=0, keepdims=True))
    scale = jnp.maximum(1.0 - t / jnp.maximum(nrm, 1e-12), 0.0)
    return y * scale


def proj_l2ball(v, z, epsilon):
    d = v - z
    nrm = jnp.sqrt(jnp.sum(d * d))
    scale = jnp.minimum(1.0, epsilon / jnp.maximum(nrm, 1e-12))
    return z + d * scale


def csctv_iterate_ref(z, a0, B, lam1, lam2, gam1, gam2, gam3, epsilon, K):
    """Pure-JAX reference: K unrolled primal-dual iterations, ONE batch elem."""
    eps = 1e-8
    x_bef = z
    a_bef = a0
    y1_bef = jnp.zeros((2,) + z.shape, z.dtype)
    y2_bef = jnp.zeros_like(z)
    x_aft = x_bef
    for k in range(K):
        g1, g2, g3 = gam1[k], gam2[k], gam3[k]
        l1, l2 = lam1[k], lam2[k]
        r = x_bef - conv_csc(a_bef, B)
        x = x_bef - g1 * (r + Dt(y1_bef) + y2_bef)               # phi^T == id
        x_aft = prox_box(x)
        a = a_bef + g2 * convT_csc(r, B)
        a_aft = prox_l1(a, g2 * l1)
        y1 = y1_bef + g3 * D(2.0 * x_aft - x_bef)
        y1_aft = y1 - g3 * prox_l12(y1 / (g3 + eps), l2 / (g3 + eps))
        y2 = y2_bef + g3 * (2.0 * x_aft - x_bef)                 # phi == id
        y2_aft = y2 - g3 * proj_l2ball(y2 / (g3 + eps), z, epsilon)
        x_bef, a_bef, y1_bef, y2_bef = x_aft, a_aft, y1_aft, y2_aft
    return x_aft


# ------------------------------- Pallas kernel --------------------------------

_ROLL_SIGN = None


def _calibrate_roll_sign():
    """One-time probe pinning pltpu.roll's shift convention to jnp.roll's.

    Returns +1 if pltpu.roll(x, s, axis) == jnp.roll(x, s, axis), else -1.
    All static stencil shifts in the main kernel are derived from this, so the
    kernel is correct under either convention.  Runs a trivial (8,128) kernel
    once (eager, outside jit)."""
    global _ROLL_SIGN
    if _ROLL_SIGN is None:
        def probe(x_ref, o_ref):
            o_ref[...] = pltpu.roll(x_ref[...], shift=1, axis=1)
        x = jnp.arange(8 * 128, dtype=jnp.float32).reshape(8, 128)
        y = pl.pallas_call(
            probe, out_shape=jax.ShapeDtypeStruct((8, 128), jnp.float32))(x)
        _ROLL_SIGN = 1 if bool(jnp.array_equal(y, jnp.roll(x, 1, axis=1))) else -1
    return _ROLL_SIGN


def _csctv_kernel(lam1_ref, lam2_ref, gam1_ref, gam2_ref, gam3_ref, eps_ref,
                  z_ref, a0_ref, B_ref, x_ref, *,
                  K, C, M, N, P, ksz, roll_sign):
    f32 = jnp.float32
    MN = M * N
    pad = ksz // 2
    eps = 1e-8

    z = z_ref[0].astype(f32)            # (C, MN)
    a_bef = a0_ref[0].astype(f32)       # (P, C, MN)
    epsilon = eps_ref[0]

    # ---- boundary masks (roll wrap-around contributions get zeroed) ----
    lane = jax.lax.broadcasted_iota(jnp.int32, (C, MN), 1)
    m_idx = lane // N
    n_idx = lane % N
    offs = [o for o in range(-pad, pad + 1) if o != 0]
    row_ok = {u: ((m_idx + u >= 0) & (m_idx + u < M)).astype(f32) for u in offs}
    col_ok = {v: ((n_idx + v >= 0) & (n_idx + v < N)).astype(f32) for v in offs}
    m_lt, m_gt = row_ok[1], row_ok[-1]
    n_lt, n_gt = col_ok[1], col_ok[-1]

    taps = [(di * ksz + dj, di - pad, dj - pad)
            for di in range(ksz) for dj in range(ksz)]

    def roll_plus(x, s):
        """y[..., f] = x[..., (f + s) mod MN] -- lane rotate on the XLU."""
        t = (-roll_sign * s) % MN
        if t == 0:
            return x
        return pltpu.roll(x, shift=t, axis=x.ndim - 1)

    def apply_mask(w, u, v):
        if u != 0:
            w = row_ok[u] * w
        if v != 0:
            w = col_ok[v] * w
        return w

    def conv_csc_k(a3):
        """out[c,f] = sum_{p,taps} B[p,c,tap] * a3[p,c, f + u*N + v] (0-padded)."""
        out = jnp.zeros((C, MN), f32)
        for (t, u, v) in taps:
            w3 = B_ref[t] * a3                 # (P, C, MN), single VPU pass
            q = w3[0]
            for p in range(1, P):              # reduce over filters: plain adds
                q = q + w3[p]
            out = out + apply_mask(roll_plus(q, u * N + v), u, v)
        return out

    def convT_csc_k(r):
        """acc[p,c,f] = sum_taps B[p,c,tap] * r[c, f - (u*N + v)] (0-padded)."""
        acc = jnp.zeros((P, C, MN), f32)
        for (t, u, v) in taps:
            rr = apply_mask(roll_plus(r, -(u * N + v)), -u, -v)   # (C, MN)
            acc = acc + B_ref[t] * rr                             # bcast over P
        return acc

    def D_k(x):
        dv = m_lt * (roll_plus(x, N) - x)
        dh = n_lt * (roll_plus(x, 1) - x)
        return dv, dh

    def Dt_k(yv, yh):
        dtv = m_gt * roll_plus(yv, -N) - m_lt * yv
        dth = n_gt * roll_plus(yh, -1) - n_lt * yh
        return dtv + dth

    def soft_threshold(v, t):
        # prox_l1: sign(v)*max(|v|-t, 0) == v - clip(v, -t, t)  (fewer VPU ops)
        return v - jnp.clip(v, -t, t)

    def prox_l12_k(yv, yh, t):
        nrm = jnp.sqrt(yv * yv + yh * yh)
        inv = pl.reciprocal(jnp.maximum(nrm, 1e-12), approx=True)   # EUP
        scale = jnp.maximum(1.0 - t * inv, 0.0)
        return yv * scale, yh * scale

    def proj_l2ball_k(v, zz, epsv):
        d = v - zz
        nrm = jnp.sqrt(jnp.sum(d * d))
        scale = jnp.minimum(1.0, epsv / jnp.maximum(nrm, 1e-12))    # scalar div
        return zz + d * scale

    x_bef = z
    y1v = jnp.zeros((C, MN), f32)
    y1h = jnp.zeros((C, MN), f32)
    y2 = jnp.zeros((C, MN), f32)
    x_aft = x_bef

    # K is small (=3); static unroll is fine.
    # TODO(synk): switch to lax.fori_loop with SMEM-indexed scalars if K > ~4.
    for it in range(K):
        g1 = gam1_ref[it]
        g2 = gam2_ref[it]
        g3 = gam3_ref[it]
        l1 = lam1_ref[it]
        l2 = lam2_ref[it]
        inv_g3 = 1.0 / (g3 + eps)            # one scalar reciprocal, reused

        r = x_bef - conv_csc_k(a_bef)
        x = x_bef - g1 * (r + Dt_k(y1v, y1h) + y2)       # phi^T == identity
        x_aft = jnp.clip(x, 0.0, 1.0)                    # prox box

        a_new = a_bef + g2 * convT_csc_k(r)              # (P, C, MN)
        a_aft = soft_threshold(a_new, g2 * l1)

        xd = 2.0 * x_aft - x_bef
        dv, dh = D_k(xd)
        y1v_n = y1v + g3 * dv
        y1h_n = y1h + g3 * dh
        pv, ph = prox_l12_k(y1v_n * inv_g3, y1h_n * inv_g3, l2 * inv_g3)
        y1v_aft = y1v_n - g3 * pv
        y1h_aft = y1h_n - g3 * ph

        y2_n = y2 + g3 * xd                              # phi == identity
        y2_aft = y2_n - g3 * proj_l2ball_k(y2_n * inv_g3, z, epsilon)

        x_bef, a_bef = x_aft, a_aft
        y1v, y1h, y2 = y1v_aft, y1h_aft, y2_aft

    x_ref[0] = x_aft.astype(x_ref.dtype)


def csctv_forward(z, a0, B, lam1, lam2, gam1, gam2, gam3, epsilon, K):
    mb, C, M, N = z.shape
    P, _, kk, _ = B.shape
    MN = M * N
    out_dtype = z.dtype
    roll_sign = _calibrate_roll_sign()

    # Lane-dense layouts: spatial flattened into the lane axis (MN = 256).
    zf = z.reshape(mb, C, MN)
    af = a0.reshape(mb, P, C, MN)
    # Per-tap weight planes pre-broadcast along lanes: B_taps[t] is a
    # ready-to-multiply (P, C, MN) tile -> no strided (...,3,3) extracts in-kernel.
    B_taps = jnp.transpose(B, (2, 3, 0, 1)).reshape(kk * kk, P, C, 1)
    B_taps = jnp.broadcast_to(B_taps, (kk * kk, P, C, MN)).astype(jnp.float32)

    smem = pl.BlockSpec(memory_space=pltpu.MemorySpace.SMEM)
    grid_spec = pltpu.PrefetchScalarGridSpec(
        num_scalar_prefetch=0,
        grid=(mb,),   # one batch element per step -> both v7x TCs busy at mb>=2
        in_specs=[smem, smem, smem, smem, smem, smem,
                  pl.BlockSpec((1, C, MN), lambda b: (b, 0, 0)),
                  pl.BlockSpec((1, P, C, MN), lambda b: (b, 0, 0, 0)),
                  pl.BlockSpec((kk * kk, P, C, MN), lambda b: (0, 0, 0, 0))],
        out_specs=pl.BlockSpec((1, C, MN), lambda b: (b, 0, 0)),
    )
    out = pl.pallas_call(
        functools.partial(_csctv_kernel, K=K, C=C, M=M, N=N, P=P, ksz=kk,
                          roll_sign=roll_sign),
        out_shape=jax.ShapeDtypeStruct((mb, C, MN), out_dtype),
        grid_spec=grid_spec,
        compiler_params=pltpu.CompilerParams(
            dimension_semantics=("parallel",)),   # batch elems are independent
    )(jnp.asarray(lam1, jnp.float32), jnp.asarray(lam2, jnp.float32),
      jnp.asarray(gam1, jnp.float32), jnp.asarray(gam2, jnp.float32),
      jnp.asarray(gam3, jnp.float32), jnp.asarray([epsilon], jnp.float32),
      zf, af, B_taps)
    return out.reshape(mb, C, M, N)


# ------------------------------ parameter setup --------------------------------

def calc_max_singular_P(B0, size=64):
    """Operator norm of the circular CSC synthesis operator built from the
    first-channel filters B0: (P, k, k)."""
    Bh = jnp.fft.fft2(B0, s=(size, size))
    return float(jnp.max(jnp.sqrt(jnp.sum(jnp.abs(Bh) ** 2, axis=0))))


if __name__ == "__main__":
    # CSCTVParams: n_channels=4, n_filters=3, kernel_size=3, K=3
    mb, C, M, N = 2, 4, 16, 16
    P, kk, K = 3, 3, 3
    alpha = 0.2

    key = jax.random.PRNGKey(0)
    kB, ka, kz = jax.random.split(key, 3)

    # Deterministic parameter init (mirrors the nn.Module __init__).
    B = 0.01 * jax.random.normal(kB, (P, C, kk, kk), jnp.float32)
    op_norm_B = calc_max_singular_P(B[:, 0])
    lam1 = jnp.full((K,), 0.01, jnp.float32)
    lam2 = jnp.full((K,), 0.01, jnp.float32)
    beta = (1.0 + op_norm_B) ** 2
    g1 = 2.0 / beta * 0.9
    g3 = 1.0 / 8.0 * (1.0 / g1 - beta / 2.0)
    gam1 = jnp.full((K,), g1, jnp.float32)
    gam2 = jnp.full((K,), g1, jnp.float32)
    gam3 = jnp.full((K,), g3, jnp.float32)

    # Inputs. a0 replaces the in-forward torch.normal init (made deterministic).
    z = jax.random.uniform(kz, (mb, C, M, N), dtype=jnp.float32)
    a0 = 0.01 * jax.random.normal(ka, (mb, P, C, M, N), jnp.float32)
    epsilon = alpha * math.sqrt(C * M * N)

    x = csctv_forward(z, a0, B, lam1, lam2, gam1, gam2, gam3, epsilon, K)
    x = jax.block_until_ready(x)

    # Pure-JAX reference check (same math, vmapped over batch).
    ref = jax.vmap(lambda zz, aa: csctv_iterate_ref(
        zz, aa, B, lam1, lam2, gam1, gam2, gam3, epsilon, K))(z, a0)
    ref = jax.block_until_ready(ref)
    err = float(jnp.max(jnp.abs(x - ref)))
    assert err < 1e-3, f"max abs error {err}"
    print("KERNEL_OK")
</pallas_src>

<mosaic_0001>
module attributes {stable_mosaic.version = 11 : i64} {
  func.func @probe(%arg0: memref<8x128xf32, #tpu.memory_space<vmem>>, %arg1: memref<8x128xf32, #tpu.memory_space<vmem>>) attributes {dimension_semantics = [], scalar_prefetch = 0 : i64, scratch_operands = 0 : i64, tpu.core_type = #tpu.core_type<tc>} {
    %c0 = arith.constant 0 : index
    %c0_0 = arith.constant 0 : index
    %0 = vector.load %arg0[%c0, %c0_0] : memref<8x128xf32, #tpu.memory_space<vmem>>, vector<8x128xf32>
    %c1_i32 = arith.constant 1 : i32
    %1 = tpu.dynamic_rotate %0 by %c1_i32 dim 1 : vector<8x128xf32>, i32 -> vector<8x128xf32>
    %c0_1 = arith.constant 0 : index
    %c0_2 = arith.constant 0 : index
    %2 = vector.load %arg1[%c0_1, %c0_2] : memref<8x128xf32, #tpu.memory_space<vmem>>, vector<8x128xf32>
    tpu.vector_store %arg1[%c0_1, %c0_2], %1 {strides = array<i32>} : memref<8x128xf32, #tpu.memory_space<vmem>>, vector<8x128xf32>,
    return
  }
}

</mosaic_0001>

<llo_original>
// kernel: tpu_custom_call.1
$region0: #{tpu_custom_call.1}
  #allocation0 [shape = 'u32[]', space=smem, size = 0x4, offset = 0x4, fixed_abs, tag = 'smem constant byte address 0x4 - core index']
  #allocation1 [shape = 'u32[72,128]{1,0:T(1,128)}', space=vmem, size = 0x9000, scoped, tag = 'internal scratch']
  %s0 = inlined_call_operand.hbm [shape: f32[8,128], index: 0, kind: input, shape index: {}]
  %s1 = inlined_call_operand.hbm [shape: f32[8,128], index: 1, kind: output, shape index: {}]
  %s2 = sld [smem:[#allocation0]]
  $region18: #{tpu_custom_call.1} parent=0
    _
  %s4 = ssub.s32 1, %s2
  %s5 = scalar_select 0, %s4, %s2
  $region1: #{tpu_custom_call.1} parent=0
    #allocation2 [shape = 'u8[4096]{0}', space=vmem, size = 0x1000, scoped, tag = 'input window, operand 0, single buffered']
    #allocation3 [shape = 's32[1]{0}', space=sflag, size = 0x4, scoped, tag = 'scoped memory for tpu_custom_call.1']
    #allocation4 [shape = 's32[1]{0}', space=sflag, size = 0x4, scoped, tag = 'scoped memory for tpu_custom_call.1']
    #allocation5 [shape = 'u8[4096]{0}', space=vmem, size = 0x1000, scoped, tag = 'output window, operand 0, single buffered']
    %6 = vsyncpa [#allocation3], 0
    %7 = vsyncpa [#allocation4], 0
    // Predicated region
    $region2: #{tpu_custom_call.1} parent=1 // pred_check
      _
    $region3: #{tpu_custom_call.1} parent=1 // pred_check_branch
      %9 = sbr.rel (0) target = $region5
    $region4: #{tpu_custom_call.1} parent=1 // pred_region
      %11 = vsyncadd [#allocation3], 0
      %s13 = sshll.u32 %s0, 4
      %s14 = int_to_ptr.hbm [resolvable:$true] %s13
      %s15 = sshll.u32 [#allocation2], 4
      %s16 = int_to_ptr.vmem [resolvable:$true] %s15
      %18 = dma.hbm_to_vmem [thread:$0]  %s14, 128, %s16, [#allocation3]
    $region5: #{tpu_custom_call.1} parent=1 // pred_fallthru
      _
    // Predicated region
    $region6: #{tpu_custom_call.1} parent=1 // pred_check
      _
    $region7: #{tpu_custom_call.1} parent=1 // pred_check_branch
      %20 = sbr.rel (0) target = $region9
    $region8: #{tpu_custom_call.1} parent=1 // pred_region
      %22 = dma.done [#allocation3], 128
    $region9: #{tpu_custom_call.1} parent=1 // pred_fallthru
      _
    %v23 = vld [vmem:[#allocation2] sm:$0xff]
    %24 = vrot.lane.b32.xlu0 %v23, 1
    %v25 = vpop.permute.xlu0 %24
    %26 = vst [vmem:[#allocation5] sm:$0xff] %v25
    // Predicated region
    $region10: #{tpu_custom_call.1} parent=1 // pred_check
      _
    $region11: #{tpu_custom_call.1} parent=1 // pred_check_branch
      %28 = sbr.rel (0) target = $region13
    $region12: #{tpu_custom_call.1} parent=1 // pred_region
      %30 = vsyncadd [#allocation4], 0
      %s32 = sshll.u32 [#allocation5], 4
      %s33 = int_to_ptr.vmem [resolvable:$true] %s32
      %s34 = sshll.u32 %s1, 4
      %s35 = int_to_ptr.hbm [resolvable:$true] %s34
      %37 = dma.vmem_to_hbm [thread:$0]  %s33, 128, %s35, [#allocation4]
    $region13: #{tpu_custom_call.1} parent=1 // pred_fallthru
      _
    // Predicated region
    $region14: #{tpu_custom_call.1} parent=1 // pred_check
      _
    $region15: #{tpu_custom_call.1} parent=1 // pred_check_branch
      %39 = sbr.rel (0) target = $region17
    $region16: #{tpu_custom_call.1} parent=1 // pred_region
      %41 = dma.done [#allocation4], 128
    $region17: #{tpu_custom_call.1} parent=1 // pred_fallthru
      _
    %42 = vsyncpa [#allocation3], 1
    %43 = vsyncpa [#allocation4], 1

</llo_original>
